<compile_context>
chip_gen: v6e
topology: v6e:2x2x1
jax: 0.10.0
libtpu: 0.0.40
codegen_flags: <defaults>
</compile_context>

<pallas_src>
import jax
import jax.numpy as jnp
from jax.experimental import pallas as pl
from jax.experimental.pallas import tpu as pltpu

EPS = 1e-5  # torch.nn.LayerNorm default eps


def _layernorm(x, gamma, beta):
    mean = jnp.mean(x, axis=-1, keepdims=True)
    var = jnp.mean((x - mean) ** 2, axis=-1, keepdims=True)  # biased, like torch
    return (x - mean) * jax.lax.rsqrt(var + EPS) * gamma + beta


def _slab_offsets(feature_dim, label_dim):
    assert feature_dim % 8 == 0
    lpad = ((label_dim + 7) // 8) * 8
    emb_off = feature_dim            # embedding table rows
    w23_off = emb_off + lpad         # folded (256, 64->128) weight rows
    small_off = w23_off + 256        # small 128-wide params
    r128 = small_off + 16
    return dict(lpad=lpad, emb_off=emb_off, w23_off=w23_off,
                small_off=small_off, r128=r128)


# slab128 small-parameter rows (offset `small_off`), lane width 128:
#   +0 bf   +1 fng  +2 fnb  +3 lng  +4 lnb  +5 wca
#   +6 B23 (64, zero-padded)  +7 w4 (64, zero-padded)  +8 scalars [bca, b4, 0...]
# slab256 rows: [0:128) w1 ; row 128 = b1.
def make_kernel(offs, n_feat, n_labels):
    emb_off = offs["emb_off"]
    w23_off = offs["w23_off"]
    sm = offs["small_off"]

    def kernel(idx_ref, feat_ref, s128_ref, s256_ref, out_ref):
        b = pl.program_id(0)

        feat = feat_ref[0]                                   # (n_feat, feature_dim)

        bf  = s128_ref[sm + 0: sm + 1, :]
        fng = s128_ref[sm + 1: sm + 2, :]
        fnb = s128_ref[sm + 2: sm + 3, :]
        lng = s128_ref[sm + 3: sm + 4, :]
        lnb = s128_ref[sm + 4: sm + 5, :]
        wca = s128_ref[sm + 5: sm + 6, :]
        b23 = s128_ref[sm + 6: sm + 7, :]                    # (1,128), lanes>=64 zero
        w4  = s128_ref[sm + 7: sm + 8, :]                    # (1,128), lanes>=64 zero
        bca = s128_ref[sm + 8: sm + 9, 0:1]                  # (1,1)
        b4  = s128_ref[sm + 8: sm + 9, 1:2]                  # (1,1)
        b1  = s256_ref[128:129, :]                           # (1,256)

        # feature_fc + feature_norm
        f = jnp.dot(feat, s128_ref[0:emb_off, :],
                    preferred_element_type=jnp.float32) + bf             # (n_feat,128)
        f = _layernorm(f, fng, fnb)

        # label embedding gather: dynamic 1-row slices of the resident table,
        # indices come from the scalar-prefetched SMEM array.
        rows = [s128_ref[pl.ds(emb_off + idx_ref[b, i], 1), :]
                for i in range(n_labels)]
        le_raw = jnp.concatenate(rows, axis=0)                           # (n_labels,128)
        le = _layernorm(le_raw, lng, lnb)

        # cross attention over concatenated rows (softmax along dim 0);
        # width-1 projection on the VPU (mul + lane reduce), not the MXU.
        x = jnp.concatenate([f, le], axis=0)                             # (n_feat+n_labels,128)
        logits = jnp.sum(x * wca, axis=-1, keepdims=True) + bca          # (.,1)
        w = jax.nn.softmax(logits, axis=0)
        ca = jnp.sum(w * x, axis=0, keepdims=True)                       # (1,128)

        # MLP + FFN heads (mlp_fc2 / ffn_fc1 folded; folded weight zero-padded
        # to 128 lanes so the extra columns stay exactly zero through the relu).
        mlp_in = ca + le                                                 # (n_labels,128)
        h = jnp.maximum(
            jnp.dot(mlp_in, s256_ref[0:128, :],
                    preferred_element_type=jnp.float32) + b1, 0.0)       # (n_labels,256)
        g = jnp.maximum(
            jnp.dot(h, s128_ref[w23_off:w23_off + 256, :],
                    preferred_element_type=jnp.float32) + b23, 0.0)      # (n_labels,128)
        score = jnp.sum(g * w4, axis=-1, keepdims=True) + b4             # (n_labels,1)

        # Lane-dense store: place the per-label column into a (1, n_labels) row
        # via a tiny identity mask (VPU mul + sublane reduce; no relayout).
        eye = (jax.lax.broadcasted_iota(jnp.int32, (n_labels, n_labels), 0) ==
               jax.lax.broadcasted_iota(jnp.int32, (n_labels, n_labels), 1)
               ).astype(jnp.float32)
        row = jnp.sum(score * eye, axis=0, keepdims=True)                # (1,n_labels)
        out_ref[0] = jax.nn.sigmoid(row)

    return kernel


def prepare_kernel_params(params, label_dim, feature_dim=384):
    """One-time offline prep: fold mlp_fc2 @ ffn_fc1 and pack everything
    constant into two HBM slabs (one 128-lane, one 256-lane)."""
    offs = _slab_offsets(feature_dim, label_dim)
    w23 = params["w2"] @ params["w3"]                         # (256, 64)
    b23 = params["b2"] @ params["w3"] + params["b3"]          # (1, 64)

    emb_off, w23_off, sm = offs["emb_off"], offs["w23_off"], offs["small_off"]
    s128 = jnp.zeros((offs["r128"], 128), jnp.float32)
    s128 = s128.at[0:feature_dim, :].set(params["wf"])
    s128 = s128.at[emb_off:emb_off + label_dim, :].set(params["emb"])
    s128 = s128.at[w23_off:w23_off + 256, 0:64].set(w23)
    s128 = s128.at[sm + 0, :].set(params["bf"][0])
    s128 = s128.at[sm + 1, :].set(params["fng"][0])
    s128 = s128.at[sm + 2, :].set(params["fnb"][0])
    s128 = s128.at[sm + 3, :].set(params["lng"][0])
    s128 = s128.at[sm + 4, :].set(params["lnb"][0])
    s128 = s128.at[sm + 5, :].set(params["wca"][:, 0])
    s128 = s128.at[sm + 6, 0:64].set(b23[0])
    s128 = s128.at[sm + 7, 0:64].set(params["w4"][:, 0])
    s128 = s128.at[sm + 8, 0].set(params["bca"][0, 0])
    s128 = s128.at[sm + 8, 1].set(params["b4"][0, 0])

    s256 = jnp.zeros((136, 256), jnp.float32)
    s256 = s256.at[0:128, :].set(params["w1"])
    s256 = s256.at[128, :].set(params["b1"][0])
    return dict(slab128=s128, slab256=s256, offs=offs)


def rewarder_forward(features, label_indices, kparams):
    """features: (B, n_feat, feature_dim) f32; label_indices: (B, n_labels) int.
    Returns (B, n_labels, 1) f32 rewards."""
    B, n_feat, feat_dim = features.shape
    _, n_labels = label_indices.shape
    s128, s256, offs = kparams["slab128"], kparams["slab256"], kparams["offs"]
    assert feat_dim == offs["emb_off"]
    idx = label_indices.astype(jnp.int32)

    kernel = make_kernel(offs, n_feat, n_labels)
    out = pl.pallas_call(
        kernel,
        out_shape=jax.ShapeDtypeStruct((B, 1, n_labels), jnp.float32),
        grid_spec=pltpu.PrefetchScalarGridSpec(
            num_scalar_prefetch=1,
            grid=(B,),
            in_specs=[
                pl.BlockSpec((1, n_feat, feat_dim), lambda b, idx_ref: (b, 0, 0)),
                # Constant block index -> DMA'd once, VMEM-resident for all steps.
                pl.BlockSpec(s128.shape, lambda b, idx_ref: (0, 0)),
                pl.BlockSpec(s256.shape, lambda b, idx_ref: (0, 0)),
            ],
            out_specs=pl.BlockSpec((1, 1, n_labels), lambda b, idx_ref: (b, 0, 0)),
        ),
        compiler_params=pltpu.CompilerParams(
            dimension_semantics=("parallel",)),   # v7x: split batch over both TCs
    )(idx, features, s128, s256)
    return out.reshape(B, n_labels, 1)


def rewarder_reference(features, label_indices, params):
    """Pure-JAX reference mirroring the PyTorch forward (single instance)."""
    f = features @ params["wf"] + params["bf"]
    f = _layernorm(f, params["fng"], params["fnb"])
    le = _layernorm(params["emb"][label_indices], params["lng"], params["lnb"])
    x = jnp.concatenate([f, le], axis=0)
    w = jax.nn.softmax(x @ params["wca"] + params["bca"], axis=0)
    ca = jnp.sum(w * x, axis=0, keepdims=True)
    h = jnp.maximum((ca + le) @ params["w1"] + params["b1"], 0.0)
    h = h @ params["w2"] + params["b2"]
    g = jnp.maximum(h @ params["w3"] + params["b3"], 0.0)
    return jax.nn.sigmoid(g @ params["w4"] + params["b4"])


def init_params(key, label_dim=100, label_embedding_dim=128, feature_dim=384):
    assert label_embedding_dim == 128, "cat(features, label_embed) requires 128-d embeddings"
    ks = jax.random.split(key, 12)

    def lin(k, fan_in, fan_out):
        kw, kb = jax.random.split(k)
        lim = 1.0 / jnp.sqrt(fan_in)
        w = jax.random.uniform(kw, (fan_in, fan_out), jnp.float32, -lim, lim)
        b = jax.random.uniform(kb, (1, fan_out), jnp.float32, -lim, lim)
        return w, b

    wf, bf = lin(ks[0], feature_dim, 128)
    wca, bca = lin(ks[1], 128, 1)
    w1, b1 = lin(ks[2], 128, 256)
    w2, b2 = lin(ks[3], 256, 128)
    w3, b3 = lin(ks[4], 128, 64)
    w4, b4 = lin(ks[5], 64, 1)
    emb = jax.random.normal(ks[6], (label_dim, label_embedding_dim), jnp.float32)
    return dict(
        wf=wf, bf=bf,
        fng=jnp.ones((1, 128), jnp.float32), fnb=jnp.zeros((1, 128), jnp.float32),
        emb=emb,
        lng=jnp.ones((1, label_embedding_dim), jnp.float32),
        lnb=jnp.zeros((1, label_embedding_dim), jnp.float32),
        wca=wca, bca=bca,
        w1=w1, b1=b1, w2=w2, b2=b2, w3=w3, b3=b3, w4=w4, b4=b4,
    )


if __name__ == "__main__":
    key = jax.random.PRNGKey(0)
    k_par, k_feat, k_idx = jax.random.split(key, 3)

    BATCH = 4             # instances (batch grid axis)
    N_FEAT_ROWS = 8       # feature tokens per instance
    N_LABELS = 8          # pseudo labels per instance
    FEATURE_DIM = 384
    LABEL_DIM = 100       # label_dim(x) = max(100, x)
    EMB_DIM = 128

    params = init_params(k_par, LABEL_DIM, EMB_DIM, FEATURE_DIM)
    kparams = prepare_kernel_params(params, LABEL_DIM, FEATURE_DIM)  # offline fold + pack

    features = jax.random.normal(
        k_feat, (BATCH, N_FEAT_ROWS, FEATURE_DIM), jnp.float32)
    label_indices = jax.random.randint(k_idx, (BATCH, N_LABELS), 0, LABEL_DIM)

    reward = rewarder_forward(features, label_indices, kparams)
    reward = jax.block_until_ready(reward)

    ref = jnp.stack(
        [rewarder_reference(features[b], label_indices[b], params)
         for b in range(BATCH)], axis=0)                      # (B, N_LABELS, 1)

    assert reward.shape == (BATCH, N_LABELS, 1)
    # Tolerance relaxed slightly vs 1e-5: the offline w2@w3 fold re-associates
    # f32 arithmetic.
    assert jnp.allclose(reward, ref, atol=1e-4, rtol=1e-4), "mismatch vs JAX reference"
    print("KERNEL_OK")
</pallas_src>

<mosaic_0001>
module attributes {stable_mosaic.version = 11 : i64} {
  func.func @kernel(%arg0: i32, %arg1: memref<4x8xi32, #tpu.memory_space<smem>>, %arg2: memref<1x8x384xf32, #tpu.memory_space<vmem>>, %arg3: memref<760x128xf32, #tpu.memory_space<vmem>>, %arg4: memref<136x256xf32, #tpu.memory_space<vmem>>, %arg5: memref<1x1x8xf32, #tpu.memory_space<vmem>>) attributes {dimension_semantics = [#tpu.dimension_semantics<parallel>], iteration_bounds = array<i64: 4>, scalar_prefetch = 1 : i64, scratch_operands = 0 : i64, tpu.core_type = #tpu.core_type<tc>, window_params = [{transform_indices = @transform_0, window_bounds = array<i64: 1, 8, 384>}, {pipeline_mode = #tpu.pipeline_mode<synchronous>, transform_indices = @transform_1, window_bounds = array<i64: 760, 128>}, {pipeline_mode = #tpu.pipeline_mode<synchronous>, transform_indices = @transform_2, window_bounds = array<i64: 136, 256>}, {transform_indices = @transform_3, window_bounds = array<i64: 1, 1, 8>}]} {
    %c0 = arith.constant 0 : index
    %c0_0 = arith.constant 0 : index
    %c0_1 = arith.constant 0 : index
    %0 = vector.load %arg2[%c0, %c0_0, %c0_1] : memref<1x8x384xf32, #tpu.memory_space<vmem>>, vector<1x8x384xf32>
    %1 = vector.shape_cast %0 : vector<1x8x384xf32> to vector<8x384xf32>
    %c744 = arith.constant 744 : index
    %c0_2 = arith.constant 0 : index
    %2 = vector.load %arg3[%c744, %c0_2] : memref<760x128xf32, #tpu.memory_space<vmem>>, vector<1x128xf32>
    %c745 = arith.constant 745 : index
    %c0_3 = arith.constant 0 : index
    %3 = vector.load %arg3[%c745, %c0_3] : memref<760x128xf32, #tpu.memory_space<vmem>>, vector<1x128xf32>
    %c746 = arith.constant 746 : index
    %c0_4 = arith.constant 0 : index
    %4 = vector.load %arg3[%c746, %c0_4] : memref<760x128xf32, #tpu.memory_space<vmem>>, vector<1x128xf32>
    %c747 = arith.constant 747 : index
    %c0_5 = arith.constant 0 : index
    %5 = vector.load %arg3[%c747, %c0_5] : memref<760x128xf32, #tpu.memory_space<vmem>>, vector<1x128xf32>
    %c748 = arith.constant 748 : index
    %c0_6 = arith.constant 0 : index
    %6 = vector.load %arg3[%c748, %c0_6] : memref<760x128xf32, #tpu.memory_space<vmem>>, vector<1x128xf32>
    %c749 = arith.constant 749 : index
    %c0_7 = arith.constant 0 : index
    %7 = vector.load %arg3[%c749, %c0_7] : memref<760x128xf32, #tpu.memory_space<vmem>>, vector<1x128xf32>
    %c750 = arith.constant 750 : index
    %c0_8 = arith.constant 0 : index
    %8 = vector.load %arg3[%c750, %c0_8] : memref<760x128xf32, #tpu.memory_space<vmem>>, vector<1x128xf32>
    %c751 = arith.constant 751 : index
    %c0_9 = arith.constant 0 : index
    %9 = vector.load %arg3[%c751, %c0_9] : memref<760x128xf32, #tpu.memory_space<vmem>>, vector<1x128xf32>
    %c752 = arith.constant 752 : index
    %c0_10 = arith.constant 0 : index
    %10 = vector.load %arg3[%c752, %c0_10] : memref<760x128xf32, #tpu.memory_space<vmem>>, vector<1x1xf32>
    %c752_11 = arith.constant 752 : index
    %c1 = arith.constant 1 : index
    %11 = vector.load %arg3[%c752_11, %c1] : memref<760x128xf32, #tpu.memory_space<vmem>>, vector<1x1xf32>
    %c128 = arith.constant 128 : index
    %c0_12 = arith.constant 0 : index
    %12 = vector.load %arg4[%c128, %c0_12] : memref<136x256xf32, #tpu.memory_space<vmem>>, vector<1x256xf32>
    %c0_13 = arith.constant 0 : index
    %c0_14 = arith.constant 0 : index
    %13 = vector.load %arg3[%c0_13, %c0_14] : memref<760x128xf32, #tpu.memory_space<vmem>>, vector<384x128xf32>
    %cst = arith.constant dense<0.000000e+00> : vector<8x128xf32>
    %14 = tpu.matmul %1, %13, %cst {dimension_numbers = #tpu.dot_dimension_numbers<[1], [0], [0], [1], [0, 0, 1, 1], [], []>} : vector<8x384xf32>, vector<384x128xf32>, vector<8x128xf32> -> vector<8x128xf32>
    %15 = vector.broadcast %2 : vector<1x128xf32> to vector<8x128xf32>
    %16 = arith.addf %14, %15 : vector<8x128xf32>
    %cst_15 = arith.constant dense<0.000000e+00> : vector<8xf32>
    %17 = vector.multi_reduction <add>, %16, %cst_15 [1] : vector<8x128xf32> to vector<8xf32>
    %18 = vector.shape_cast %17 : vector<8xf32> to vector<8x1xf32>
    %cst_16 = arith.constant 1.280000e+02 : f32
    %19 = vector.broadcast %cst_16 : f32 to vector<8x1xf32>
    %20 = arith.divf %18, %19 : vector<8x1xf32>
    %21 = vector.broadcast %20 : vector<8x1xf32> to vector<8x128xf32>
    %22 = arith.subf %16, %21 : vector<8x128xf32>
    %23 = arith.mulf %22, %22 : vector<8x128xf32>
    %cst_17 = arith.constant dense<0.000000e+00> : vector<8xf32>
    %24 = vector.multi_reduction <add>, %23, %cst_17 [1] : vector<8x128xf32> to vector<8xf32>
    %25 = vector.shape_cast %24 : vector<8xf32> to vector<8x1xf32>
    %cst_18 = arith.constant 1.280000e+02 : f32
    %26 = vector.broadcast %cst_18 : f32 to vector<8x1xf32>
    %27 = arith.divf %25, %26 : vector<8x1xf32>
    %28 = vector.broadcast %20 : vector<8x1xf32> to vector<8x128xf32>
    %29 = arith.subf %16, %28 : vector<8x128xf32>
    %cst_19 = arith.constant 9.99999974E-6 : f32
    %30 = vector.broadcast %cst_19 : f32 to vector<8x1xf32>
    %31 = arith.addf %27, %30 : vector<8x1xf32>
    %32 = math.rsqrt %31 : vector<8x1xf32>
    %33 = vector.broadcast %32 : vector<8x1xf32> to vector<8x128xf32>
    %34 = arith.mulf %29, %33 : vector<8x128xf32>
    %35 = vector.broadcast %3 : vector<1x128xf32> to vector<8x128xf32>
    %36 = arith.mulf %34, %35 : vector<8x128xf32>
    %37 = vector.broadcast %4 : vector<1x128xf32> to vector<8x128xf32>
    %38 = arith.addf %36, %37 : vector<8x128xf32>
    %39 = arith.index_cast %arg0 : i32 to index
    %c0_20 = arith.constant 0 : index
    %40 = memref.load %arg1[%39, %c0_20] : memref<4x8xi32, #tpu.memory_space<smem>>
    %c384_i32 = arith.constant 384 : i32
    %41 = arith.addi %c384_i32, %40 : i32
    %42 = arith.index_cast %41 : i32 to index
    %c0_21 = arith.constant 0 : index
    %43 = vector.load %arg3[%42, %c0_21] : memref<760x128xf32, #tpu.memory_space<vmem>>, vector<1x128xf32>
    %44 = arith.index_cast %arg0 : i32 to index
    %c1_22 = arith.constant 1 : index
    %45 = memref.load %arg1[%44, %c1_22] : memref<4x8xi32, #tpu.memory_space<smem>>
    %c384_i32_23 = arith.constant 384 : i32
    %46 = arith.addi %c384_i32_23, %45 : i32
    %47 = arith.index_cast %46 : i32 to index
    %c0_24 = arith.constant 0 : index
    %48 = vector.load %arg3[%47, %c0_24] : memref<760x128xf32, #tpu.memory_space<vmem>>, vector<1x128xf32>
    %49 = arith.index_cast %arg0 : i32 to index
    %c2 = arith.constant 2 : index
    %50 = memref.load %arg1[%49, %c2] : memref<4x8xi32, #tpu.memory_space<smem>>
    %c384_i32_25 = arith.constant 384 : i32
    %51 = arith.addi %c384_i32_25, %50 : i32
    %52 = arith.index_cast %51 : i32 to index
    %c0_26 = arith.constant 0 : index
    %53 = vector.load %arg3[%52, %c0_26] : memref<760x128xf32, #tpu.memory_space<vmem>>, vector<1x128xf32>
    %54 = arith.index_cast %arg0 : i32 to index
    %c3 = arith.constant 3 : index
    %55 = memref.load %arg1[%54, %c3] : memref<4x8xi32, #tpu.memory_space<smem>>
    %c384_i32_27 = arith.constant 384 : i32
    %56 = arith.addi %c384_i32_27, %55 : i32
    %57 = arith.index_cast %56 : i32 to index
    %c0_28 = arith.constant 0 : index
    %58 = vector.load %arg3[%57, %c0_28] : memref<760x128xf32, #tpu.memory_space<vmem>>, vector<1x128xf32>
    %59 = arith.index_cast %arg0 : i32 to index
    %c4 = arith.constant 4 : index
    %60 = memref.load %arg1[%59, %c4] : memref<4x8xi32, #tpu.memory_space<smem>>
    %c384_i32_29 = arith.constant 384 : i32
    %61 = arith.addi %c384_i32_29, %60 : i32
    %62 = arith.index_cast %61 : i32 to index
    %c0_30 = arith.constant 0 : index
    %63 = vector.load %arg3[%62, %c0_30] : memref<760x128xf32, #tpu.memory_space<vmem>>, vector<1x128xf32>
    %64 = arith.index_cast %arg0 : i32 to index
    %c5 = arith.constant 5 : index
    %65 = memref.load %arg1[%64, %c5] : memref<4x8xi32, #tpu.memory_space<smem>>
    %c384_i32_31 = arith.constant 384 : i32
    %66 = arith.addi %c384_i32_31, %65 : i32
    %67 = arith.index_cast %66 : i32 to index
    %c0_32 = arith.constant 0 : index
    %68 = vector.load %arg3[%67, %c0_32] : memref<760x128xf32, #tpu.memory_space<vmem>>, vector<1x128xf32>
    %69 = arith.index_cast %arg0 : i32 to index
    %c6 = arith.constant 6 : index
    %70 = memref.load %arg1[%69, %c6] : memref<4x8xi32, #tpu.memory_space<smem>>
    %c384_i32_33 = arith.constant 384 : i32
    %71 = arith.addi %c384_i32_33, %70 : i32
    %72 = arith.index_cast %71 : i32 to index
    %c0_34 = arith.constant 0 : index
    %73 = vector.load %arg3[%72, %c0_34] : memref<760x128xf32, #tpu.memory_space<vmem>>, vector<1x128xf32>
    %74 = arith.index_cast %arg0 : i32 to index
    %c7 = arith.constant 7 : index
    %75 = memref.load %arg1[%74, %c7] : memref<4x8xi32, #tpu.memory_space<smem>>
    %c384_i32_35 = arith.constant 384 : i32
    %76 = arith.addi %c384_i32_35, %75 : i32
    %77 = arith.index_cast %76 : i32 to index
    %c0_36 = arith.constant 0 : index
    %78 = vector.load %arg3[%77, %c0_36] : memref<760x128xf32, #tpu.memory_space<vmem>>, vector<1x128xf32>
    %79 = tpu.concatenate %43, %48, %53, %58, %63, %68, %73, %78 in 0 : vector<1x128xf32>, vector<1x128xf32>, vector<1x128xf32>, vector<1x128xf32>, vector<1x128xf32>, vector<1x128xf32>, vector<1x128xf32>, vector<1x128xf32> -> vector<8x128xf32>
    %cst_37 = arith.constant dense<0.000000e+00> : vector<8xf32>
    %80 = vector.multi_reduction <add>, %79, %cst_37 [1] : vector<8x128xf32> to vector<8xf32>
    %81 = vector.shape_cast %80 : vector<8xf32> to vector<8x1xf32>
    %cst_38 = arith.constant 1.280000e+02 : f32
    %82 = vector.broadcast %cst_38 : f32 to vector<8x1xf32>
    %83 = arith.divf %81, %82 : vector<8x1xf32>
    %84 = vector.broadcast %83 : vector<8x1xf32> to vector<8x128xf32>
    %85 = arith.subf %79, %84 : vector<8x128xf32>
    %86 = arith.mulf %85, %85 : vector<8x128xf32>
    %cst_39 = arith.constant dense<0.000000e+00> : vector<8xf32>
    %87 = vector.multi_reduction <add>, %86, %cst_39 [1] : vector<8x128xf32> to vector<8xf32>
    %88 = vector.shape_cast %87 : vector<8xf32> to vector<8x1xf32>
    %cst_40 = arith.constant 1.280000e+02 : f32
    %89 = vector.broadcast %cst_40 : f32 to vector<8x1xf32>
    %90 = arith.divf %88, %89 : vector<8x1xf32>
    %91 = vector.broadcast %83 : vector<8x1xf32> to vector<8x128xf32>
    %92 = arith.subf %79, %91 : vector<8x128xf32>
    %cst_41 = arith.constant 9.99999974E-6 : f32
    %93 = vector.broadcast %cst_41 : f32 to vector<8x1xf32>
    %94 = arith.addf %90, %93 : vector<8x1xf32>
    %95 = math.rsqrt %94 : vector<8x1xf32>
    %96 = vector.broadcast %95 : vector<8x1xf32> to vector<8x128xf32>
    %97 = arith.mulf %92, %96 : vector<8x128xf32>
    %98 = vector.broadcast %5 : vector<1x128xf32> to vector<8x128xf32>
    %99 = arith.mulf %97, %98 : vector<8x128xf32>
    %100 = vector.broadcast %6 : vector<1x128xf32> to vector<8x128xf32>
    %101 = arith.addf %99, %100 : vector<8x128xf32>
    %102 = tpu.concatenate %38, %101 in 0 : vector<8x128xf32>, vector<8x128xf32> -> vector<16x128xf32>
    %103 = vector.broadcast %7 : vector<1x128xf32> to vector<16x128xf32>
    %104 = arith.mulf %102, %103 : vector<16x128xf32>
    %cst_42 = arith.constant dense<0.000000e+00> : vector<16xf32>
    %105 = vector.multi_reduction <add>, %104, %cst_42 [1] : vector<16x128xf32> to vector<16xf32>
    %106 = vector.shape_cast %105 : vector<16xf32> to vector<16x1xf32>
    %107 = vector.broadcast %10 : vector<1x1xf32> to vector<16x1xf32>
    %108 = arith.addf %106, %107 : vector<16x1xf32>
    %cst_43 = arith.constant dense<0xFF800000> : vector<1xf32>
    %109 = vector.multi_reduction <maximumf>, %108, %cst_43 [0] : vector<16x1xf32> to vector<1xf32>
    %cst_44 = arith.constant 0xFF800000 : f32
    %110 = vector.broadcast %cst_44 : f32 to vector<1xf32>
    %111 = arith.maximumf %110, %109 : vector<1xf32>
    %112 = vector.shape_cast %111 : vector<1xf32> to vector<1x1xf32>
    %113 = vector.broadcast %112 : vector<1x1xf32> to vector<16x1xf32>
    %114 = arith.subf %108, %113 : vector<16x1xf32>
    %115 = math.exp %114 : vector<16x1xf32>
    %cst_45 = arith.constant dense<0.000000e+00> : vector<1xf32>
    %116 = vector.multi_reduction <add>, %115, %cst_45 [0] : vector<16x1xf32> to vector<1xf32>
    %117 = vector.shape_cast %116 : vector<1xf32> to vector<1x1xf32>
    %118 = vector.broadcast %117 : vector<1x1xf32> to vector<16x1xf32>
    %119 = arith.divf %115, %118 : vector<16x1xf32>
    %120 = vector.broadcast %119 : vector<16x1xf32> to vector<16x128xf32>
    %121 = arith.mulf %120, %102 : vector<16x128xf32>
    %cst_46 = arith.constant dense<0.000000e+00> : vector<128xf32>
    %122 = vector.multi_reduction <add>, %121, %cst_46 [0] : vector<16x128xf32> to vector<128xf32>
    %123 = vector.shape_cast %122 : vector<128xf32> to vector<1x128xf32>
    %124 = vector.broadcast %123 : vector<1x128xf32> to vector<8x128xf32>
    %125 = arith.addf %124, %101 : vector<8x128xf32>
    %c0_47 = arith.constant 0 : index
    %c0_48 = arith.constant 0 : index
    %126 = vector.load %arg4[%c0_47, %c0_48] : memref<136x256xf32, #tpu.memory_space<vmem>>, vector<128x256xf32>
    %cst_49 = arith.constant dense<0.000000e+00> : vector<8x256xf32>
    %127 = tpu.matmul %125, %126, %cst_49 {dimension_numbers = #tpu.dot_dimension_numbers<[1], [0], [0], [1], [0, 0, 1, 1], [], []>} : vector<8x128xf32>, vector<128x256xf32>, vector<8x256xf32> -> vector<8x256xf32>
    %128 = vector.broadcast %12 : vector<1x256xf32> to vector<8x256xf32>
    %129 = arith.addf %127, %128 : vector<8x256xf32>
    %cst_50 = arith.constant 0.000000e+00 : f32
    %130 = vector.broadcast %cst_50 : f32 to vector<8x256xf32>
    %131 = arith.maximumf %129, %130 : vector<8x256xf32>
    %c488 = arith.constant 488 : index
    %c0_51 = arith.constant 0 : index
    %132 = vector.load %arg3[%c488, %c0_51] : memref<760x128xf32, #tpu.memory_space<vmem>>, vector<256x128xf32>
    %cst_52 = arith.constant dense<0.000000e+00> : vector<8x128xf32>
    %133 = tpu.matmul %131, %132, %cst_52 {dimension_numbers = #tpu.dot_dimension_numbers<[1], [0], [0], [1], [0, 0, 1, 1], [], []>} : vector<8x256xf32>, vector<256x128xf32>, vector<8x128xf32> -> vector<8x128xf32>
    %134 = vector.broadcast %8 : vector<1x128xf32> to vector<8x128xf32>
    %135 = arith.addf %133, %134 : vector<8x128xf32>
    %cst_53 = arith.constant 0.000000e+00 : f32
    %136 = vector.broadcast %cst_53 : f32 to vector<8x128xf32>
    %137 = arith.maximumf %135, %136 : vector<8x128xf32>
    %138 = vector.broadcast %9 : vector<1x128xf32> to vector<8x128xf32>
    %139 = arith.mulf %137, %138 : vector<8x128xf32>
    %cst_54 = arith.constant dense<0.000000e+00> : vector<8xf32>
    %140 = vector.multi_reduction <add>, %139, %cst_54 [1] : vector<8x128xf32> to vector<8xf32>
    %141 = vector.shape_cast %140 : vector<8xf32> to vector<8x1xf32>
    %142 = vector.broadcast %11 : vector<1x1xf32> to vector<8x1xf32>
    %143 = arith.addf %141, %142 : vector<8x1xf32>
    %144 = tpu.iota {dimensions = array<i32: 0>} : vector<8x8xi32>
    %145 = tpu.iota {dimensions = array<i32: 1>} : vector<8x8xi32>
    %146 = arith.cmpi eq, %144, %145 : vector<8x8xi32>
    %147 = arith.extui %146 : vector<8x8xi1> to vector<8x8xi32>
    %148 = arith.sitofp %147 : vector<8x8xi32> to vector<8x8xf32>
    %149 = vector.broadcast %143 : vector<8x1xf32> to vector<8x8xf32>
    %150 = arith.mulf %149, %148 : vector<8x8xf32>
    %cst_55 = arith.constant dense<0.000000e+00> : vector<8xf32>
    %151 = vector.multi_reduction <add>, %150, %cst_55 [0] : vector<8x8xf32> to vector<8xf32>
    %152 = vector.shape_cast %151 : vector<8xf32> to vector<1x8xf32>
    %153 = arith.negf %152 : vector<1x8xf32>
    %154 = math.exp %153 : vector<1x8xf32>
    %cst_56 = arith.constant 1.000000e+00 : f32
    %155 = vector.broadcast %cst_56 : f32 to vector<1x8xf32>
    %156 = arith.addf %155, %154 : vector<1x8xf32>
    %157 = arith.divf %155, %156 : vector<1x8xf32>
    %c0_57 = arith.constant 0 : index
    %c0_58 = arith.constant 0 : index
    %c0_59 = arith.constant 0 : index
    %158 = vector.load %arg5[%c0_57, %c0_58, %c0_59] : memref<1x1x8xf32, #tpu.memory_space<vmem>>, vector<1x1x8xf32>
    %159 = vector.shape_cast %158 : vector<1x1x8xf32> to vector<1x8xf32>
    %160 = vector.shape_cast %157 : vector<1x8xf32> to vector<1x1x8xf32>
    tpu.vector_store %arg5[%c0_57, %c0_58, %c0_59], %160 {strides = array<i32>} : memref<1x1x8xf32, #tpu.memory_space<vmem>>, vector<1x1x8xf32>,
    return
  }
  func.func @transform_0(%arg0: i32, %arg1: memref<4x8xi32, #tpu.memory_space<smem>>) -> (i32, i32, i32) {
    %c0_i32 = arith.constant 0 : i32
    %c0_i32_0 = arith.constant 0 : i32
    %c0_i32_1 = arith.constant 0 : i32
    return %arg0, %c0_i32, %c0_i32_0 : i32, i32, i32
  }
  func.func @transform_1(%arg0: i32, %arg1: memref<4x8xi32, #tpu.memory_space<smem>>) -> (i32, i32) {
    %c0_i32 = arith.constant 0 : i32
    %c0_i32_0 = arith.constant 0 : i32
    %c0_i32_1 = arith.constant 0 : i32
    return %c0_i32, %c0_i32_0 : i32, i32
  }
  func.func @transform_2(%arg0: i32, %arg1: memref<4x8xi32, #tpu.memory_space<smem>>) -> (i32, i32) {
    %c0_i32 = arith.constant 0 : i32
    %c0_i32_0 = arith.constant 0 : i32
    %c0_i32_1 = arith.constant 0 : i32
    return %c0_i32, %c0_i32_0 : i32, i32
  }
  func.func @transform_3(%arg0: i32, %arg1: memref<4x8xi32, #tpu.memory_space<smem>>) -> (i32, i32, i32) {
    %c0_i32 = arith.constant 0 : i32
    %c0_i32_0 = arith.constant 0 : i32
    %c0_i32_1 = arith.constant 0 : i32
    return %arg0, %c0_i32, %c0_i32_0 : i32, i32, i32
  }
}

</mosaic_0001>

<llo_original>
// kernel: tpu_custom_call.1
$region0: #{tpu_custom_call.1}
  #allocation0 [shape = 'u32[]', space=smem, size = 0x4, offset = 0x4, fixed_abs, tag = 'smem constant byte address 0x4 - core index']
  #allocation1 [shape = 'u32[144,128]{1,0:T(1,128)}', space=vmem, size = 0x12000, scoped, tag = 'internal scratch']
  #allocation2 [shape = 's32[1]{0}', space=sflag, size = 0x4, scoped, tag = 'scoped memory for tpu_custom_call.1']
  #allocation3 [shape = 'u8[2048]{0}', space=smem, size = 0x800, scoped, tag = 'prefetched SMEM operand 0']
  %s0 = inlined_call_operand.hbm [shape: s32[4,8], index: 0, kind: input, shape index: {}]
  %s1 = inlined_call_operand.hbm [shape: f32[4,8,384], index: 1, kind: input, shape index: {}]
  %s2 = inlined_call_operand.hbm [shape: f32[760,128], index: 2, kind: input, shape index: {}]
  %s3 = inlined_call_operand.hbm [shape: f32[136,256], index: 3, kind: input, shape index: {}]
  %s4 = inlined_call_operand.hbm [shape: f32[4,1,8], index: 4, kind: output, shape index: {}]
  %s5 = sld [smem:[#allocation0]]
  $region57: #{tpu_custom_call.1} parent=0
    _
  %s7 = ssub.s32 1, %s5
  %s8 = scalar_select 0, %s7, %s5
  %10 = dma.hbm_to_smem %s0, 64, [#allocation3], [#allocation2]
  %11 = dma.done [#allocation2], 64
  %12 = sfence
  $region1: #{tpu_custom_call.1} parent=0
    #allocation4 [shape = 'u8[24576]{0}', space=vmem, size = 0x6000, scoped, tag = 'input window, operand 1']
    #allocation5 [shape = 's32[2]{0}', space=sflag, size = 0x8, scoped, tag = 'scoped memory for tpu_custom_call.1']
    #allocation6 [shape = 's32[2]{0}', space=sflag, size = 0x8, scoped, tag = 'scoped memory for tpu_custom_call.1']
    #allocation7 [shape = 'u8[389120]{0}', space=vmem, size = 0x5f000, scoped, tag = 'input window, operand 2, single buffered']
    #allocation8 [shape = 's32[1]{0}', space=sflag, size = 0x4, scoped, tag = 'scoped memory for tpu_custom_call.1']
    #allocation9 [shape = 'u8[139264]{0}', space=vmem, size = 0x22000, scoped, tag = 'input window, operand 3, single buffered']
    #allocation10 [shape = 'u8[1024]{0}', space=vmem, size = 0x400, scoped, tag = 'output window, operand 0']
    %13 = vsyncpa [#allocation5], 0
    %s14 = scalar_lea.sflag [#allocation5], 1
    %15 = vsyncpa %s14, 0
    %16 = vsyncpa [#allocation8], 0
    %17 = vsyncpa [#allocation6], 0
    %s18 = scalar_lea.sflag [#allocation6], 1
    %19 = vsyncpa %s18, 0
    loop: start=0, step=1, limit=6
    $region2: #{tpu_custom_call.1} parent=1 // loop_pre_header
      _
    $region3: #{tpu_custom_call.1} parent=1 // loop_header
      %s21 = sphi 0, %s25
      %p22 = scmp.ge.s32.totalorder %s21, 6
      %s31 = sphi 0, %s33
      %s34 = sphi 0, %s31
      %s35 = sphi 0, %s34
      %s51 = sphi 0, %s35
      %s55 = sphi 0, %s55
      %s57 = sphi 0, %s55
      %s58 = sphi 0, %s57
      %s72 = sphi 0, %s58
      %s76 = sphi 0, %s76
      %s78 = sphi 0, %s76
      %s79 = sphi 0, %s78
      %s93 = sphi 0, %s79
      %s99 = sphi 0, %s101
      %s102 = sphi 0, %s99
      %s103 = sphi 0, %s102
      %s119 = sphi 0, %s103
    $region4: #{tpu_custom_call.1} parent=1 // loop_header_branch
      %24 = sbr.rel (%p22) target = $region8
    $region5: #{tpu_custom_call.1} parent=1 // loop_body
      %s26 = ssub.s32 %s21, 1
      %s27 = ssub.s32 %s21, 2
      %s28 = sadd.s32 %s21, 1
      %s29 = ssub.s32 %s21, %s28
      %p30 = scmp.eq.s32.totalorder %s29, 0
      %s32 = sadd.s32 %s31, 1
      %s33 = scalar_select %p30, %s31, %s32
      %p36 = pneg %p30
      %p37 = scmp.eq.s32.totalorder %s21, 3
      %p38 = por %p36, %p37
      %p39 = scmp.ne.s32.totalorder %s31, %s34
      %p40 = scmp.eq.s32.totalorder %s21, 0
      %p41 = por %p39, %p40
      %p42 = scmp.ne.s32.totalorder %s31, %s34
      %p43 = scmp.eq.s32.totalorder %s26, 3
      %p44 = por %p42, %p43
      %p45 = scmp.ne.s32.totalorder %s34, %s35
      %p46 = scmp.eq.s32.totalorder %s26, 0
      %p47 = por %p45, %p46
      %p48 = scmp.ne.s32.totalorder %s34, %s35
      %p49 = scmp.eq.s32.totalorder %s27, 3
      %p50 = por %p48, %p49
      %p52 = scmp.ne.s32.totalorder %s35, %s51
      %p53 = scmp.eq.s32.totalorder %s27, 0
      %p54 = por %p52, %p53
      %s56 = sadd.s32 %s55, 1
      %p59 = scmp.eq.s32.totalorder %s21, 3
      %p60 = scmp.ne.s32.totalorder %s55, %s57
      %p61 = scmp.eq.s32.totalorder %s21, 0
      %p62 = por %p60, %p61
      %p63 = scmp.ne.s32.totalorder %s55, %s57
      %p64 = scmp.eq.s32.totalorder %s26, 3
      %p65 = por %p63, %p64
      %p66 = scmp.ne.s32.totalorder %s57, %s58
      %p67 = scmp.eq.s32.totalorder %s26, 0
      %p68 = por %p66, %p67
      %p69 = scmp.ne.s32.totalorder %s57, %s58
      %p70 = scmp.eq.s32.totalorder %s27, 3
      %p71 = por %p69, %p70
      %p73 = scmp.ne.s32.totalorder %s58, %s72
      %p74 = scmp.eq.s32.totalorder %s27, 0
      %p75 = por %p73, %p74
      %s77 = sadd.s32 %s76, 1
      %p80 = scmp.eq.s32.totalorder %s21, 3
      %p81 = scmp.ne.s32.totalorder %s76, %s78
      %p82 = scmp.eq.s32.totalorder %s21, 0
      %p83 = por %p81, %p82
      %p84 = scmp.ne.s32.totalorder %s76, %s78
      %p85 = scmp.eq.s32.totalorder %s26, 3
      %p86 = por %p84, %p85
      %p87 = scmp.ne.s32.totalorder %s78, %s79
      %p88 = scmp.eq.s32.totalorder %s26, 0
      %p89 = por %p87, %p88
      %p90 = scmp.ne.s32.totalorder %s78, %s79
      %p91 = scmp.eq.s32.totalorder %s27, 3
      %p92 = por %p90, %p91
      %p94 = scmp.ne.s32.totalorder %s79, %s93
      %p95 = scmp.eq.s32.totalorder %s27, 0
      %p96 = por %p94, %p95
      %s97 = ssub.s32 %s21, %s28
      %p98 = scmp.eq.s32.totalorder %s97, 0
      %s100 = sadd.s32 %s99, 1
      %s101 = scalar_select %p98, %s99, %s100
      %p104 = pneg %p98
      %p105 = scmp.eq.s32.totalorder %s21, 3
      %p106 = por %p104, %p105
      %p107 = scmp.ne.s32.totalorder %s99, %s102
      %p108 = scmp.eq.s32.totalorder %s21, 0
      %p109 = por %p107, %p108
      %p110 = scmp.ne.s32.totalorder %s99, %s102
      %p111 = scmp.eq.s32.totalorder %s26, 3
      %p112 = por %p110, %p111
      %p113 = scmp.ne.s32.totalorder %s102, %s103
      %p114 = scmp.eq.s32.totalorder %s26, 0
      %p115 = por %p113, %p114
      %p116 = scmp.ne.s32.totalorder %s102, %s103
      %p117 = scmp.eq.s32.totalorder %s27, 3
      %p118 = por %p116, %p117
      %p120 = scmp.ne.s32.totalorder %s103, %s119
      %p121 = scmp.eq.s32.totalorder %s27, 0
      %p122 = por %p120, %p121
      %p123 = scmp.le.s32.totalorder 1, %s21
      %p124 = scmp.lt.s32.totalorder %s21, 5
      %p125 = pnand %p123, %p124
      %p126 = pneg %p125
      // Predicated region
      $region9: #{tpu_custom_call.1} parent=5 // pred_check
        _
      $region10: #{tpu_custom_call.1} parent=5 // pred_check_branch
        %128 = sbr.rel (%p125) target = $region12
      $region11: #{tpu_custom_call.1} parent=5 // pred_region
        %s129 = ssub.s32 %s21, 1
        // Predicated region
        $region13: #{tpu_custom_call.1} parent=11 // pred_check
          %p130 = pneg %p68
        $region14: #{tpu_custom_call.1} parent=11 // pred_check_branch
          %132 = sbr.rel (%p130) target = $region16
        $region15: #{tpu_custom_call.1} parent=11 // pred_region
          %s134 = ssub.s32 12160, 12160
          %135 = vsyncadd [#allocation8], %s134
          %s136 = sshll.u32 [#allocation7], 4
          %s137 = int_to_ptr.vmem [resolvable:$true] %s136
          %142 = dma.hbm_to_vmem [thread:$0]  %s2, 12160, %s137, [#allocation8], 128, 128, 8
        $region16: #{tpu_custom_call.1} parent=11 // pred_fallthru
          _
        // Predicated region
        $region17: #{tpu_custom_call.1} parent=11 // pred_check
          %p143 = pneg %p89
        $region18: #{tpu_custom_call.1} parent=11 // pred_check_branch
          %145 = sbr.rel (%p143) target = $region20
        $region19: #{tpu_custom_call.1} parent=11 // pred_region
          %s147 = ssub.s32 4352, 4352
          %148 = vsyncadd [#allocation8], %s147
          %s149 = sshll.u32 [#allocation9], 4
          %s150 = int_to_ptr.vmem [resolvable:$true] %s149
          %155 = dma.hbm_to_vmem [thread:$0]  %s3, 4352, %s150, [#allocation8], 256, 256, 16
        $region20: #{tpu_custom_call.1} parent=11 // pred_fallthru
          _
      $region12: #{tpu_custom_call.1} parent=5 // pred_fallthru
        _
      %p156 = scmp.lt.s32.totalorder %s21, 4
      // Predicated region
      $region21: #{tpu_custom_call.1} parent=5 // pred_check
        %p157 = pneg %p156
      $region22: #{tpu_custom_call.1} parent=5 // pred_check_branch
        %159 = sbr.rel (%p157) target = $region24
      $region23: #{tpu_custom_call.1} parent=5 // pred_region
        // Predicated region
        $region25: #{tpu_custom_call.1} parent=23 // pred_check
          %p160 = pneg %p41
        $region26: #{tpu_custom_call.1} parent=23 // pred_check_branch
          %162 = sbr.rel (%p160) target = $region28
        $region27: #{tpu_custom_call.1} parent=23 // pred_region
          %s163 = sand.u32 %s31, 1
          %s164 = scalar_lea.sflag [#allocation5], %s163
          %s165 = sand.u32 %s31, 1
          %s166 = smul.addr %s165, 24
          %s167 = scalar_lea.vmem [#allocation4], %s166
          %s169 = ssub.s32 384, 384
          %170 = vsyncadd %s164, %s169
          %s171 = smul.addr %s21, 3
          %s172 = smul.addr %s171, 128
          %s173 = scalar_lea.hbm %s1, %s172
          %s175 = sshll.u32 %s167, 4
          %s176 = int_to_ptr.vmem [resolvable:$true] %s175
          %178 = dma.hbm_to_vmem [thread:$0]  %s173, 384, %s176, %s164
        $region28: #{tpu_custom_call.1} parent=23 // pred_fallthru
          _
      $region24: #{tpu_custom_call.1} parent=5 // pred_fallthru
        _
      %p179 = scmp.le.s32.totalorder 1, %s21
      %p180 = scmp.lt.s32.totalorder %s21, 5
      %p181 = pnand %p179, %p180
      %p182 = pneg %p181
      // Predicated region
      $region29: #{tpu_custom_call.1} parent=5 // pred_check
        _
      $region30: #{tpu_custom_call.1} parent=5 // pred_check_branch
        %184 = sbr.rel (%p181) target = $region32
      $region31: #{tpu_custom_call.1} parent=5 // pred_region
        %s185 = ssub.s32 %s21, 1
        %s186 = sand.u32 %s34, 1
        %s187 = scalar_lea.sflag [#allocation5], %s186
        %s188 = sand.u32 %s34, 1
        %s189 = smul.addr %s188, 24
        %s190 = scalar_lea.vmem [#allocation4], %s189
        // Predicated region
        $region33: #{tpu_custom_call.1} parent=31 // pred_check
          %p191 = pneg %p47
        $region34: #{tpu_custom_call.1} parent=31 // pred_check_branch
          %193 = sbr.rel (%p191) target = $region36
        $region35: #{tpu_custom_call.1} parent=31 // pred_region
          %194 = dma.done %s187, 384
        $region36: #{tpu_custom_call.1} parent=31 // pred_fallthru
          _
        // Predicated region
        $region37: #{tpu_custom_call.1} parent=31 // pred_check
          %p195 = pneg %p68
        $region38: #{tpu_custom_call.1} parent=31 // pred_check_branch
          %197 = sbr.rel (%p195) target = $region40
        $region39: #{tpu_custom_call.1} parent=31 // pred_region
          %198 = dma.done [#allocation8], 12160
        $region40: #{tpu_custom_call.1} parent=31 // pred_fallthru
          _
        // Predicated region
        $region41: #{tpu_custom_call.1} parent=31 // pred_check
          %p199 = pneg %p89
        $region42: #{tpu_custom_call.1} parent=31 // pred_check_branch
          %201 = sbr.rel (%p199) target = $region44
        $region43: #{tpu_custom_call.1} parent=31 // pred_region
          %202 = dma.done [#allocation8], 4352
        $region44: #{tpu_custom_call.1} parent=31 // pred_fallthru
          _
        %s203 = sand.u32 %s34, 1
        %s204 = scalar_lea.sflag [#allocation5], %s203
        %s205 = sand.u32 %s34, 1
        %s206 = smul.addr %s205, 24
        %s207 = scalar_lea.vmem [#allocation4], %s206
        %p208 = pneg %p47
        %p209 = pneg %p44
        %p210 = pneg %p68
        %p211 = pneg %p65
        %p212 = pneg %p89
        %p213 = pneg %p86
        %p214 = pneg %p115
        %p215 = pneg %p112
        %s216 = sand.u32 %s102, 1
        %s217 = scalar_lea.sflag [#allocation6], %s216
        %s218 = sand.u32 %s102, 1
        %s219 = scalar_lea.vmem [#allocation10], %s218
        %v220 = vld [vmem:[%s190] sm:$0xff]
        %v221 = vld [vmem:[%s190 + $0x8] sm:$0xff]
        %v222 = vld [vmem:[%s190 + $0x10] sm:$0xff]
        %v223 = vld [vmem:[#allocation7 + $0x2e8] sm:$0x1]
        %v224 = vld [vmem:[#allocation7 + $0x2e9] sm:$0x1]
        %v225 = vld [vmem:[#allocation7 + $0x2ea] sm:$0x1]
        %v226 = vld [vmem:[#allocation7 + $0x2eb] sm:$0x1]
        %v227 = vld [vmem:[#allocation7 + $0x2ec] sm:$0x1]
        %v228 = vld [vmem:[#allocation7 + $0x2ed] sm:$0x1]
        %v229 = vld [vmem:[#allocation7 + $0x2ee] sm:$0x1]
        %v230 = vld [vmem:[#allocation7 + $0x2ef] sm:$0x1]
        %v231 = vld [vmem:[#allocation7 + $0x2f0] sm:$0x1]
        %s232 = scalar_lea.vmem [#allocation9], 256
        %v233 = vld [vmem:[%s232] ss:$8 sm:$0x3]
        %v234 = vld [vmem:[#allocation7] sm:$0xff]
        %v235 = vld [vmem:[#allocation7 + $0x8] sm:$0xff]
        %v236 = vld [vmem:[#allocation7 + $0x10] sm:$0xff]
        %v237 = vld [vmem:[#allocation7 + $0x18] sm:$0xff]
        %v238 = vld [vmem:[#allocation7 + $0x20] sm:$0xff]
        %v239 = vld [vmem:[#allocation7 + $0x28] sm:$0xff]
        %v240 = vld [vmem:[#allocation7 + $0x30] sm:$0xff]
        %v241 = vld [vmem:[#allocation7 + $0x38] sm:$0xff]
        %v242 = vld [vmem:[#allocation7 + $0x40] sm:$0xff]
        %v243 = vld [vmem:[#allocation7 + $0x48] sm:$0xff]
        %v244 = vld [vmem:[#allocation7 + $0x50] sm:$0xff]
        %v245 = vld [vmem:[#allocation7 + $0x58] sm:$0xff]
        %v246 = vld [vmem:[#allocation7 + $0x60] sm:$0xff]
        %v247 = vld [vmem:[#allocation7 + $0x68] sm:$0xff]
        %v248 = vld [vmem:[#allocation7 + $0x70] sm:$0xff]
        %v249 = vld [vmem:[#allocation7 + $0x78] sm:$0xff]
        %v250 = vld [vmem:[#allocation7 + $0x80] sm:$0xff]
        %v251 = vld [vmem:[#allocation7 + $0x88] sm:$0xff]
        %v252 = vld [vmem:[#allocation7 + $0x90] sm:$0xff]
        %v253 = vld [vmem:[#allocation7 + $0x98] sm:$0xff]
        %v254 = vld [vmem:[#allocation7 + $0xa0] sm:$0xff]
        %v255 = vld [vmem:[#allocation7 + $0xa8] sm:$0xff]
        %v256 = vld [vmem:[#allocation7 + $0xb0] sm:$0xff]
        %v257 = vld [vmem:[#allocation7 + $0xb8] sm:$0xff]
        %v258 = vld [vmem:[#allocation7 + $0xc0] sm:$0xff]
        %v259 = vld [vmem:[#allocation7 + $0xc8] sm:$0xff]
        %v260 = vld [vmem:[#allocation7 + $0xd0] sm:$0xff]
        %v261 = vld [vmem:[#allocation7 + $0xd8] sm:$0xff]
        %v262 = vld [vmem:[#allocation7 + $0xe0] sm:$0xff]
        %v263 = vld [vmem:[#allocation7 + $0xe8] sm:$0xff]
        %v264 = vld [vmem:[#allocation7 + $0xf0] sm:$0xff]
        %v265 = vld [vmem:[#allocation7 + $0xf8] sm:$0xff]
        %v266 = vld [vmem:[#allocation7 + $0x100] sm:$0xff]
        %v267 = vld [vmem:[#allocation7 + $0x108] sm:$0xff]
        %v268 = vld [vmem:[#allocation7 + $0x110] sm:$0xff]
        %v269 = vld [vmem:[#allocation7 + $0x118] sm:$0xff]
        %v270 = vld [vmem:[#allocation7 + $0x120] sm:$0xff]
        %v271 = vld [vmem:[#allocation7 + $0x128] sm:$0xff]
        %v272 = vld [vmem:[#allocation7 + $0x130] sm:$0xff]
        %v273 = vld [vmem:[#allocation7 + $0x138] sm:$0xff]
        %v274 = vld [vmem:[#allocation7 + $0x140] sm:$0xff]
        %v275 = vld [vmem:[#allocation7 + $0x148] sm:$0xff]
        %v276 = vld [vmem:[#allocation7 + $0x150] sm:$0xff]
        %v277 = vld [vmem:[#allocation7 + $0x158] sm:$0xff]
        %v278 = vld [vmem:[#allocation7 + $0x160] sm:$0xff]
        %v279 = vld [vmem:[#allocation7 + $0x168] sm:$0xff]
        %v280 = vld [vmem:[#allocation7 + $0x170] sm:$0xff]
        %v281 = vld [vmem:[#allocation7 + $0x178] sm:$0xff]
        %v282 = vlaneseq
        %v283 = vshrl.u32 %v282, 7
        %v284 = vsub.s32 0, %v283
        %v285 = vrot.slane %v223, %v284
        %286 = vmatprep.subr.mxu0 0.0
        %287 = vmatpush1.msra.mxu0 %v249
        %288 = vmatprep.subr.mxu0 0.0
        %289 = vmatpush1.msra.mxu0 %v248
        %290 = vmatprep.subr.mxu0 0.0
        %291 = vmatpush1.msra.mxu0 %v247
        %292 = vmatprep.subr.mxu0 0.0
        %293 = vmatpush1.msra.mxu0 %v246
        %294 = vmatprep.subr.mxu0 0.0
        %295 = vmatpush1.msra.mxu0 %v245
        %296 = vmatprep.subr.mxu0 0.0
        %297 = vmatpush1.msra.mxu0 %v244
        %298 = vmatprep.subr.mxu0 0.0
        %299 = vmatpush1.msra.mxu0 %v243
        %300 = vmatprep.subr.mxu0 0.0
        %301 = vmatpush1.msra.mxu0 %v242
        %302 = vmatprep.subr.mxu0 0.0
        %303 = vmatpush1.msra.mxu0 %v241
        %304 = vmatprep.subr.mxu0 0.0
        %305 = vmatpush1.msra.mxu0 %v240
        %306 = vmatprep.subr.mxu0 0.0
        %307 = vmatpush1.msra.mxu0 %v239
        %308 = vmatprep.subr.mxu0 0.0
        %309 = vmatpush1.msra.mxu0 %v238
        %310 = vmatprep.subr.mxu0 0.0
        %311 = vmatpush1.msra.mxu0 %v237
        %312 = vmatprep.subr.mxu0 0.0
        %313 = vmatpush1.msra.mxu0 %v236
        %314 = vmatprep.subr.mxu0 0.0
        %315 = vmatpush1.msra.mxu0 %v235
        %316 = vmatprep.subr.mxu0 0.0
        %317 = vmatpush1.msra.mxu0 %v234
        %318 = vmatprep.subr.mxu0 0.0
        %319 = vmatpush2.msra.mxu0 %v265
        %320 = vmatprep.subr.mxu0 0.0
        %321 = vmatpush2.msra.mxu0 %v264
        %322 = vmatprep.subr.mxu0 0.0
        %323 = vmatpush2.msra.mxu0 %v263
        %324 = vmatprep.subr.mxu0 0.0
        %325 = vmatpush2.msra.mxu0 %v262
        %326 = vmatprep.subr.mxu0 0.0
        %327 = vmatpush2.msra.mxu0 %v261
        %328 = vmatprep.subr.mxu0 0.0
        %329 = vmatpush2.msra.mxu0 %v260
        %330 = vmatprep.subr.mxu0 0.0
        %331 = vmatpush2.msra.mxu0 %v259
        %332 = vmatprep.subr.mxu0 0.0
        %333 = vmatpush2.msra.mxu0 %v258
        %334 = vmatprep.subr.mxu0 0.0
        %335 = vmatpush2.msra.mxu0 %v257
        %336 = vmatprep.subr.mxu0 0.0
        %337 = vmatpush2.msra.mxu0 %v256
        %338 = vmatprep.subr.mxu0 0.0
        %339 = vmatpush2.msra.mxu0 %v255
        %340 = vmatprep.subr.mxu0 0.0
        %341 = vmatpush2.msra.mxu0 %v254
        %342 = vmatprep.subr.mxu0 0.0
        %343 = vmatpush2.msra.mxu0 %v253
        %344 = vmatprep.subr.mxu0 0.0
        %345 = vmatpush2.msra.mxu0 %v252
        %346 = vmatprep.subr.mxu0 0.0
        %347 = vmatpush2.msra.mxu0 %v251
        %348 = vmatprep.subr.mxu0 0.0
        %349 = vmatpush2.msra.mxu0 %v250
        %350 = vmatprep.mubr.f32.mxu0 %v221
        %351 = vmatmul.mubr.f32.gmra.mxu0 %v220
        %v352 = vpop.f32.mrf.mxu0
        %v353 = vadd.f32 %v285, %v352
        %v354 = vpop.f32.mrf.mxu0
        %355 = vdwg.mxu0
        %356 = vmatprep.subr.mxu0 0.0
        %357 = vmatpush1.msra.mxu0 %v281
        %358 = vmatprep.subr.mxu0 0.0
        %359 = vmatpush1.msra.mxu0 %v280
        %360 = vmatprep.subr.mxu0 0.0
        %361 = vmatpush1.msra.mxu0 %v279
        %362 = vmatprep.subr.mxu0 0.0
        %363 = vmatpush1.msra.mxu0 %v278
        %364 = vmatprep.subr.mxu0 0.0
        %365 = vmatpush1.msra.mxu0 %v277
        %366 = vmatprep.subr.mxu0 0.0
        %367 = vmatpush1.msra.mxu0 %v276
        %368 = vmatprep.subr.mxu0 0.0
        %369 = vmatpush1.msra.mxu0 %v275
        %370 = vmatprep.subr.mxu0 0.0
        %371 = vmatpush1.msra.mxu0 %v274
        %372 = vmatprep.subr.mxu0 0.0
        %373 = vmatpush1.msra.mxu0 %v273
        %374 = vmatprep.subr.mxu0 0.0
        %375 = vmatpush1.msra.mxu0 %v272
        %376 = vmatprep.subr.mxu0 0.0
        %377 = vmatpush1.msra.mxu0 %v271
        %378 = vmatprep.subr.mxu0 0.0
        %379 = vmatpush1.msra.mxu0 %v270
        %380 = vmatprep.subr.mxu0 0.0
        %381 = vmatpush1.msra.mxu0 %v269
        %382 = vmatprep.subr.mxu0 0.0
        %383 = vmatpush1.msra.mxu0 %v268
        %384 = vmatprep.subr.mxu0 0.0
        %385 = vmatpush1.msra.mxu0 %v267
        %386 = vmatprep.subr.mxu0 0.0
        %387 = vmatpush1.msra.mxu0 %v266
        %388 = vmatprep.subr.mxu0 0.0
        %389 = vmatpush2.msra.mxu0 0.0
        %390 = vmatprep.subr.mxu0 0.0
        %391 = vmatpush2.msra.mxu0 0.0
        %392 = vmatprep.subr.mxu0 0.0
        %393 = vmatpush2.msra.mxu0 0.0
        %394 = vmatprep.subr.mxu0 0.0
        %395 = vmatpush2.msra.mxu0 0.0
        %396 = vmatprep.subr.mxu0 0.0
        %397 = vmatpush2.msra.mxu0 0.0
        %398 = vmatprep.subr.mxu0 0.0
        %399 = vmatpush2.msra.mxu0 0.0
        %400 = vmatprep.subr.mxu0 0.0
        %401 = vmatpush2.msra.mxu0 0.0
        %402 = vmatprep.subr.mxu0 0.0
        %403 = vmatpush2.msra.mxu0 0.0
        %404 = vmatprep.subr.mxu0 0.0
        %405 = vmatpush2.msra.mxu0 0.0
        %406 = vmatprep.subr.mxu0 0.0
        %407 = vmatpush2.msra.mxu0 0.0
        %408 = vmatprep.subr.mxu0 0.0
        %409 = vmatpush2.msra.mxu0 0.0
        %410 = vmatprep.subr.mxu0 0.0
        %411 = vmatpush2.msra.mxu0 0.0
        %412 = vmatprep.subr.mxu0 0.0
        %413 = vmatpush2.msra.mxu0 0.0
        %414 = vmatprep.subr.mxu0 0.0
        %415 = vmatpush2.msra.mxu0 0.0
        %416 = vmatprep.subr.mxu0 0.0
        %417 = vmatpush2.msra.mxu0 0.0
        %418 = vmatprep.subr.mxu0 0.0
        %419 = vmatpush2.msra.mxu0 0.0
        %420 = vmatprep.mubr.f32.mxu0 0.0
        %421 = vmatmul.mubr.f32.gmra.mxu0 %v222
        %v422 = vpop.f32.mrf.mxu0
        %v423 = vadd.f32 %v353, %v422
        %v424 = vpop.f32.mrf.mxu0
        %425 = vdwg.mxu0
        %426 = vadd.xlane.f32.xlu0 %v423
        %v427 = vpop.xlane.xlu0 %426
        %v428 = vrcp.pop 128.0
        %v429 = vmul.f32 %v427, %v428
        %v430 = vsub.f32 %v423, %v429
        %v431 = vmul.f32 %v430, %v430
        %432 = vadd.xlane.f32.xlu0 %v431
        %v433 = vpop.xlane.xlu0 %432
        %v434 = vmul.f32 %v433, %v428
        %v435 = vadd.f32 %v434, 1e-05
        %v436 = vrsqrt.pop %v435
        %v437 = vmul.f32 %v430, %v436
        %v438 = vlaneseq
        %v439 = vshrl.u32 %v438, 7
        %v440 = vsub.s32 0, %v439
        %v441 = vrot.slane %v224, %v440
        %v442 = vmul.f32 %v437, %v441
        %v443 = vlaneseq
        %v444 = vshrl.u32 %v443, 7
        %v445 = vsub.s32 0, %v444
        %v446 = vrot.slane %v225, %v445
        %v447 = vadd.f32 %v442, %v446
        %s448 = smul.u32 %s26, 128
        %s449 = sld [smem:[#allocation3 + %s448]]
        %s450 = sadd.s32 %s449, 384
        %s451 = scalar_lea.vmem [#allocation7], %s450
        %v452 = vld [vmem:[%s451] sm:$0x1]
        %s453 = sadd.s32 %s448, 1
        %s454 = sld [smem:[#allocation3 + %s453]]
        %s455 = sadd.s32 %s454, 384
        %s456 = scalar_lea.vmem [#allocation7], %s455
        %v457 = vld [vmem:[%s456] sm:$0x1]
        %s458 = sadd.s32 %s448, 2
        %s459 = sld [smem:[#allocation3 + %s458]]
        %s460 = sadd.s32 %s459, 384
        %s461 = scalar_lea.vmem [#allocation7], %s460
        %v462 = vld [vmem:[%s461] sm:$0x1]
        %s463 = sadd.s32 %s448, 3
        %s464 = sld [smem:[#allocation3 + %s463]]
        %s465 = sadd.s32 %s464, 384
        %s466 = scalar_lea.vmem [#allocation7], %s465
        %v467 = vld [vmem:[%s466] sm:$0x1]
        %s468 = sadd.s32 %s448, 4
        %s469 = sld [smem:[#allocation3 + %s468]]
        %s470 = sadd.s32 %s469, 384
        %s471 = scalar_lea.vmem [#allocation7], %s470
        %v472 = vld [vmem:[%s471] sm:$0x1]
        %s473 = sadd.s32 %s448, 5
        %s474 = sld [smem:[#allocation3 + %s473]]
        %s475 = sadd.s32 %s474, 384
        %s476 = scalar_lea.vmem [#allocation7], %s475
        %v477 = vld [vmem:[%s476] sm:$0x1]
        %s478 = sadd.s32 %s448, 6
        %s479 = sld [smem:[#allocation3 + %s478]]
        %s480 = sadd.s32 %s479, 384
        %s481 = scalar_lea.vmem [#allocation7], %s480
        %v482 = vld [vmem:[%s481] sm:$0x1]
        %s483 = sadd.s32 %s448, 7
        %s484 = sld [smem:[#allocation3 + %s483]]
        %s485 = sadd.s32 %s484, 384
        %s486 = scalar_lea.vmem [#allocation7], %s485
        %v487 = vld [vmem:[%s486] sm:$0x1]
        %v489 = vrot.slane %v457, 7
        %v492 = vrot.slane %v462, 6
        %v495 = vrot.slane %v467, 5
        %v498 = vrot.slane %v472, 4
        %v501 = vrot.slane %v477, 3
        %v504 = vrot.slane %v482, 2
        %v507 = vrot.slane %v487, 1
        %vm509 = vcmask 1040384
        %v510 = vsel %vm509, %v452, %v489
        %vm511 = vcmask 1041408
        %v512 = vsel %vm511, %v510, %v492
        %vm513 = vcmask 1042432
        %v514 = vsel %vm513, %v512, %v495
        %vm515 = vcmask 1043456
        %v516 = vsel %vm515, %v514, %v498
        %vm517 = vcmask 1044480
        %v518 = vsel %vm517, %v516, %v501
        %vm519 = vcmask 1045504
        %v520 = vsel %vm519, %v518, %v504
        %vm521 = vcmask 1046528
        %v522 = vsel %vm521, %v520, %v507
        %523 = vadd.xlane.f32.xlu0 %v522
        %v524 = vpop.xlane.xlu0 %523
        %v525 = vmul.f32 %v524, %v428
        %v526 = vsub.f32 %v522, %v525
        %v527 = vmul.f32 %v526, %v526
        %528 = vadd.xlane.f32.xlu0 %v527
        %v529 = vpop.xlane.xlu0 %528
        %v530 = vmul.f32 %v529, %v428
        %v531 = vadd.f32 %v530, 1e-05
        %v532 = vrsqrt.pop %v531
        %v533 = vmul.f32 %v526, %v532
        %v534 = vlaneseq
        %v535 = vshrl.u32 %v534, 7
        %v536 = vsub.s32 0, %v535
        %v537 = vrot.slane %v226, %v536
        %v538 = vmul.f32 %v533, %v537
        %v539 = vlaneseq
        %v540 = vshrl.u32 %v539, 7
        %v541 = vsub.s32 0, %v540
        %v542 = vrot.slane %v227, %v541
        %v543 = vadd.f32 %v538, %v542
        %v544 = vlaneseq
        %v545 = vshrl.u32 %v544, 7
        %v546 = vsub.s32 0, %v545
        %v547 = vrot.slane %v228, %v546
        %v548 = vmul.f32 %v447, %v547
        %v549 = vmul.f32 %v543, %v547
        %550 = vadd.xlane.f32.xlu0 %v548
        %v551 = vpop.xlane.xlu0 %550
        %552 = vadd.xlane.f32.xlu0 %v549
        %v553 = vpop.xlane.xlu0 %552
        %v554 = vlaneseq
        %v555 = vshrl.u32 %v554, 7
        %v556 = vsub.s32 0, %v555
        %v557 = vrot.slane %v231, %v556
        %v558 = vadd.f32 %v551, %v557
        %v559 = vadd.f32 %v553, %v557
        %vm560 = vcmask 7168
        %v561 = vsel %vm560, %v558, -inf
        %v562 = vsel %vm560, %v559, -inf
        %v563 = vmax.f32 %v561, %v562
        %v564 = vrot.slane %v563, 4
        %v565 = vmax.f32 %v563, %v564
        %v566 = vrot.slane %v565, 2
        %v567 = vmax.f32 %v565, %v566
        %v568 = vrot.slane %v567, 1
        %v569 = vmax.f32 %v567, %v568
        %v570 = vsub.f32 %v558, %v569
        %v571 = vsub.f32 %v559, %v569
        %v572 = vmul.f32 %v570, 1.442695
        %v573 = vpow.pop %v572
        %v574 = vmul.f32 %v571, 1.442695
        %v575 = vpow.pop %v574
        %v576 = vsel %vm560, %v573, 0.0
        %v577 = vsel %vm560, %v575, 0.0
        %v578 = vadd.f32 %v576, %v577
        %v579 = vrot.slane %v578, 4
        %v580 = vadd.f32 %v578, %v579
        %v581 = vrot.slane %v580, 2
        %v582 = vadd.f32 %v580, %v581
        %v583 = vrot.slane %v582, 1
        %v584 = vadd.f32 %v582, %v583
        %v585 = vrcp.pop %v584
        %v586 = vmul.f32 %v573, %v585
        %v587 = vmul.f32 %v575, %v585
        %589 = vset.pattern.permute.xlu0 0
        %590 = vperm.xlu0 %589, %v586
        %v591 = vpop.permute.xlu0 %590
        %594 = vset.pattern.permute.xlu0 0
        %595 = vperm.xlu0 %594, %v587
        %v596 = vpop.permute.xlu0 %595
        %v598 = vmul.f32 %v591, %v447
        %v599 = vmul.f32 %v596, %v543
        %v600 = vadd.f32 %v598, %v599
        %v601 = vrot.slane %v600, 4
        %v602 = vadd.f32 %v600, %v601
        %v603 = vrot.slane %v602, 2
        %v604 = vadd.f32 %v602, %v603
        %v605 = vrot.slane %v604, 1
        %v606 = vadd.f32 %v604, %v605
        %v607 = vadd.f32 %v606, %v543
        %v608 = vld [vmem:[#allocation9] sm:$0xff]
        %v609 = vld [vmem:[#allocation9 + $0x8] sm:$0xff]
        %v610 = vld [vmem:[#allocation9 + $0x10] sm:$0xff]
        %v611 = vld [vmem:[#allocation9 + $0x18] sm:$0xff]
        %v612 = vld [vmem:[#allocation9 + $0x20] sm:$0xff]
        %v613 = vld [vmem:[#allocation9 + $0x28] sm:$0xff]
        %v614 = vld [vmem:[#allocation9 + $0x30] sm:$0xff]
        %v615 = vld [vmem:[#allocation9 + $0x38] sm:$0xff]
        %v616 = vld [vmem:[#allocation9 + $0x40] sm:$0xff]
        %v617 = vld [vmem:[#allocation9 + $0x48] sm:$0xff]
        %v618 = vld [vmem:[#allocation9 + $0x50] sm:$0xff]
        %v619 = vld [vmem:[#allocation9 + $0x58] sm:$0xff]
        %v620 = vld [vmem:[#allocation9 + $0x60] sm:$0xff]
        %v621 = vld [vmem:[#allocation9 + $0x68] sm:$0xff]
        %v622 = vld [vmem:[#allocation9 + $0x70] sm:$0xff]
        %v623 = vld [vmem:[#allocation9 + $0x78] sm:$0xff]
        %v624 = vld [vmem:[#allocation9 + $0x80] sm:$0xff]
        %v625 = vld [vmem:[#allocation9 + $0x88] sm:$0xff]
        %v626 = vld [vmem:[#allocation9 + $0x90] sm:$0xff]
        %v627 = vld [vmem:[#allocation9 + $0x98] sm:$0xff]
        %v628 = vld [vmem:[#allocation9 + $0xa0] sm:$0xff]
        %v629 = vld [vmem:[#allocation9 + $0xa8] sm:$0xff]
        %v630 = vld [vmem:[#allocation9 + $0xb0] sm:$0xff]
        %v631 = vld [vmem:[#allocation9 + $0xb8] sm:$0xff]
        %v632 = vld [vmem:[#allocation9 + $0xc0] sm:$0xff]
        %v633 = vld [vmem:[#allocation9 + $0xc8] sm:$0xff]
        %v634 = vld [vmem:[#allocation9 + $0xd0] sm:$0xff]
        %v635 = vld [vmem:[#allocation9 + $0xd8] sm:$0xff]
        %v636 = vld [vmem:[#allocation9 + $0xe0] sm:$0xff]
        %v637 = vld [vmem:[#allocation9 + $0xe8] sm:$0xff]
        %v638 = vld [vmem:[#allocation9 + $0xf0] sm:$0xff]
        %v639 = vld [vmem:[#allocation9 + $0xf8] sm:$0xff]
        %v641 = vlaneseq
        %v642 = vshrl.u32 %v641, 7
        %v643 = vsub.s32 0, %v642
        %v644 = vrot.slane %v233, %v643
        %v645 = vlaneseq
        %v646 = vshrl.u32 %v645, 7
        %v647 = vsub.s32 1, %v646
        %v648 = vrot.slane %v233, %v647
        %651 = vmatprep.subr.mxu0 %v639
        %652 = vmatpush1.msra.mxu0 %v638
        %653 = vmatprep.subr.mxu0 %v637
        %654 = vmatpush1.msra.mxu0 %v636
        %655 = vmatprep.subr.mxu0 %v635
        %656 = vmatpush1.msra.mxu0 %v634
        %657 = vmatprep.subr.mxu0 %v633
        %658 = vmatpush1.msra.mxu0 %v632
        %659 = vmatprep.subr.mxu0 %v631
        %660 = vmatpush1.msra.mxu0 %v630
        %661 = vmatprep.subr.mxu0 %v629
        %662 = vmatpush1.msra.mxu0 %v628
        %663 = vmatprep.subr.mxu0 %v627
        %664 = vmatpush1.msra.mxu0 %v626
        %665 = vmatprep.subr.mxu0 %v625
        %666 = vmatpush1.msra.mxu0 %v624
        %667 = vmatprep.subr.mxu0 %v623
        %668 = vmatpush1.msra.mxu0 %v622
        %669 = vmatprep.subr.mxu0 %v621
        %670 = vmatpush1.msra.mxu0 %v620
        %671 = vmatprep.subr.mxu0 %v619
        %672 = vmatpush1.msra.mxu0 %v618
        %673 = vmatprep.subr.mxu0 %v617
        %674 = vmatpush1.msra.mxu0 %v616
        %675 = vmatprep.subr.mxu0 %v615
        %676 = vmatpush1.msra.mxu0 %v614
        %677 = vmatprep.subr.mxu0 %v613
        %678 = vmatpush1.msra.mxu0 %v612
        %679 = vmatprep.subr.mxu0 %v611
        %680 = vmatpush1.msra.mxu0 %v610
        %681 = vmatprep.subr.mxu0 %v609
        %682 = vmatpush1.msra.mxu0 %v608
        %683 = vmatprep.subr.mxu0 0.0
        %684 = vmatpush2.msra.mxu0 0.0
        %685 = vmatprep.subr.mxu0 0.0
        %686 = vmatpush2.msra.mxu0 0.0
        %687 = vmatprep.subr.mxu0 0.0
        %688 = vmatpush2.msra.mxu0 0.0
        %689 = vmatprep.subr.mxu0 0.0
        %690 = vmatpush2.msra.mxu0 0.0
        %691 = vmatprep.subr.mxu0 0.0
        %692 = vmatpush2.msra.mxu0 0.0
        %693 = vmatprep.subr.mxu0 0.0
        %694 = vmatpush2.msra.mxu0 0.0
        %695 = vmatprep.subr.mxu0 0.0
        %696 = vmatpush2.msra.mxu0 0.0
        %697 = vmatprep.subr.mxu0 0.0
        %698 = vmatpush2.msra.mxu0 0.0
        %699 = vmatprep.subr.mxu0 0.0
        %700 = vmatpush2.msra.mxu0 0.0
        %701 = vmatprep.subr.mxu0 0.0
        %702 = vmatpush2.msra.mxu0 0.0
        %703 = vmatprep.subr.mxu0 0.0
        %704 = vmatpush2.msra.mxu0 0.0
        %705 = vmatprep.subr.mxu0 0.0
        %706 = vmatpush2.msra.mxu0 0.0
        %707 = vmatprep.subr.mxu0 0.0
        %708 = vmatpush2.msra.mxu0 0.0
        %709 = vmatprep.subr.mxu0 0.0
        %710 = vmatpush2.msra.mxu0 0.0
        %711 = vmatprep.subr.mxu0 0.0
        %712 = vmatpush2.msra.mxu0 0.0
        %713 = vmatprep.subr.mxu0 0.0
        %714 = vmatpush2.msra.mxu0 0.0
        %715 = vmatprep.mubr.f32.mxu0 0.0
        %716 = vmatmul.mubr.f32.gmra.mxu0 %v607
        %v717 = vpop.f32.mrf.mxu0
        %v718 = vadd.f32 %v644, %v717
        %v719 = vpop.f32.mrf.mxu0
        %v720 = vadd.f32 %v648, %v719
        %721 = vdwg.mxu0
        %v722 = vmax.f32 %v718, 0.0
        %v723 = vmax.f32 %v720, 0.0
        %v724 = vld [vmem:[#allocation7 + $0x1e8] sm:$0xff]
        %v725 = vld [vmem:[#allocation7 + $0x1f0] sm:$0xff]
        %v726 = vld [vmem:[#allocation7 + $0x1f8] sm:$0xff]
        %v727 = vld [vmem:[#allocation7 + $0x200] sm:$0xff]
        %v728 = vld [vmem:[#allocation7 + $0x208] sm:$0xff]
        %v729 = vld [vmem:[#allocation7 + $0x210] sm:$0xff]
        %v730 = vld [vmem:[#allocation7 + $0x218] sm:$0xff]
        %v731 = vld [vmem:[#allocation7 + $0x220] sm:$0xff]
        %v732 = vld [vmem:[#allocation7 + $0x228] sm:$0xff]
        %v733 = vld [vmem:[#allocation7 + $0x230] sm:$0xff]
        %v734 = vld [vmem:[#allocation7 + $0x238] sm:$0xff]
        %v735 = vld [vmem:[#allocation7 + $0x240] sm:$0xff]
        %v736 = vld [vmem:[#allocation7 + $0x248] sm:$0xff]
        %v737 = vld [vmem:[#allocation7 + $0x250] sm:$0xff]
        %v738 = vld [vmem:[#allocation7 + $0x258] sm:$0xff]
        %v739 = vld [vmem:[#allocation7 + $0x260] sm:$0xff]
        %v740 = vld [vmem:[#allocation7 + $0x268] sm:$0xff]
        %v741 = vld [vmem:[#allocation7 + $0x270] sm:$0xff]
        %v742 = vld [vmem:[#allocation7 + $0x278] sm:$0xff]
        %v743 = vld [vmem:[#allocation7 + $0x280] sm:$0xff]
        %v744 = vld [vmem:[#allocation7 + $0x288] sm:$0xff]
        %v745 = vld [vmem:[#allocation7 + $0x290] sm:$0xff]
        %v746 = vld [vmem:[#allocation7 + $0x298] sm:$0xff]
        %v747 = vld [vmem:[#allocation7 + $0x2a0] sm:$0xff]
        %v748 = vld [vmem:[#allocation7 + $0x2a8] sm:$0xff]
        %v749 = vld [vmem:[#allocation7 + $0x2b0] sm:$0xff]
        %v750 = vld [vmem:[#allocation7 + $0x2b8] sm:$0xff]
        %v751 = vld [vmem:[#allocation7 + $0x2c0] sm:$0xff]
        %v752 = vld [vmem:[#allocation7 + $0x2c8] sm:$0xff]
        %v753 = vld [vmem:[#allocation7 + $0x2d0] sm:$0xff]
        %v754 = vld [vmem:[#allocation7 + $0x2d8] sm:$0xff]
        %v755 = vld [vmem:[#allocation7 + $0x2e0] sm:$0xff]
        %v756 = vlaneseq
        %v757 = vshrl.u32 %v756, 7
        %v758 = vsub.s32 0, %v757
        %v759 = vrot.slane %v229, %v758
        %760 = vmatprep.subr.mxu0 0.0
        %761 = vmatpush1.msra.mxu0 %v739
        %762 = vmatprep.subr.mxu0 0.0
        %763 = vmatpush1.msra.mxu0 %v738
        %764 = vmatprep.subr.mxu0 0.0
        %765 = vmatpush1.msra.mxu0 %v737
        %766 = vmatprep.subr.mxu0 0.0
        %767 = vmatpush1.msra.mxu0 %v736
        %768 = vmatprep.subr.mxu0 0.0
        %769 = vmatpush1.msra.mxu0 %v735
        %770 = vmatprep.subr.mxu0 0.0
        %771 = vmatpush1.msra.mxu0 %v734
        %772 = vmatprep.subr.mxu0 0.0
        %773 = vmatpush1.msra.mxu0 %v733
        %774 = vmatprep.subr.mxu0 0.0
        %775 = vmatpush1.msra.mxu0 %v732
        %776 = vmatprep.subr.mxu0 0.0
        %777 = vmatpush1.msra.mxu0 %v731
        %778 = vmatprep.subr.mxu0 0.0
        %779 = vmatpush1.msra.mxu0 %v730
        %780 = vmatprep.subr.mxu0 0.0
        %781 = vmatpush1.msra.mxu0 %v729
        %782 = vmatprep.subr.mxu0 0.0
        %783 = vmatpush1.msra.mxu0 %v728
        %784 = vmatprep.subr.mxu0 0.0
        %785 = vmatpush1.msra.mxu0 %v727
        %786 = vmatprep.subr.mxu0 0.0
        %787 = vmatpush1.msra.mxu0 %v726
        %788 = vmatprep.subr.mxu0 0.0
        %789 = vmatpush1.msra.mxu0 %v725
        %790 = vmatprep.subr.mxu0 0.0
        %791 = vmatpush1.msra.mxu0 %v724
        %792 = vmatprep.subr.mxu0 0.0
        %793 = vmatpush2.msra.mxu0 %v755
        %794 = vmatprep.subr.mxu0 0.0
        %795 = vmatpush2.msra.mxu0 %v754
        %796 = vmatprep.subr.mxu0 0.0
        %797 = vmatpush2.msra.mxu0 %v753
        %798 = vmatprep.subr.mxu0 0.0
        %799 = vmatpush2.msra.mxu0 %v752
        %800 = vmatprep.subr.mxu0 0.0
        %801 = vmatpush2.msra.mxu0 %v751
        %802 = vmatprep.subr.mxu0 0.0
        %803 = vmatpush2.msra.mxu0 %v750
        %804 = vmatprep.subr.mxu0 0.0
        %805 = vmatpush2.msra.mxu0 %v749
        %806 = vmatprep.subr.mxu0 0.0
        %807 = vmatpush2.msra.mxu0 %v748
        %808 = vmatprep.subr.mxu0 0.0
        %809 = vmatpush2.msra.mxu0 %v747
        %810 = vmatprep.subr.mxu0 0.0
        %811 = vmatpush2.msra.mxu0 %v746
        %812 = vmatprep.subr.mxu0 0.0
        %813 = vmatpush2.msra.mxu0 %v745
        %814 = vmatprep.subr.mxu0 0.0
        %815 = vmatpush2.msra.mxu0 %v744
        %816 = vmatprep.subr.mxu0 0.0
        %817 = vmatpush2.msra.mxu0 %v743
        %818 = vmatprep.subr.mxu0 0.0
        %819 = vmatpush2.msra.mxu0 %v742
        %820 = vmatprep.subr.mxu0 0.0
        %821 = vmatpush2.msra.mxu0 %v741
        %822 = vmatprep.subr.mxu0 0.0
        %823 = vmatpush2.msra.mxu0 %v740
        %824 = vmatprep.mubr.f32.mxu0 %v723
        %825 = vmatmul.mubr.f32.gmra.mxu0 %v722
        %v826 = vpop.f32.mrf.mxu0
        %v827 = vadd.f32 %v759, %v826
        %v828 = vpop.f32.mrf.mxu0
        %829 = vdwg.mxu0
        %v830 = vmax.f32 %v827, 0.0
        %v831 = vlaneseq
        %v832 = vshrl.u32 %v831, 7
        %v833 = vsub.s32 0, %v832
        %v834 = vrot.slane %v230, %v833
        %v835 = vmul.f32 %v830, %v834
        %836 = vadd.xlane.f32.xlu0 %v835
        %v837 = vpop.xlane.xlu0 %836
        %v838 = vadd.f32 %v837, %v557
        %v839 = vlaneseq
        %v840 = vshrl.u32 %v839, 7
        %v841 = vlaneseq
        %v842 = vand.u32 %v841, 127
        %vm843 = vcmp.eq.s32.totalorder %v840, %v842
        %v844 = vsel %vm843, 1, 0
        %v845 = vcvt.s32.f32 %v844
        %847 = vset.pattern.permute.xlu0 1
        %848 = vperm.xlu0 %847, %v838
        %v849 = vpop.permute.xlu0 %848
        %v851 = vmul.f32 %v849, %v845
        %vm852 = vcmask 64512
        %v853 = vsel %vm852, %v851, 0.0
        %v854 = vrot.slane %v853, 4
        %v855 = vadd.f32 %v853, %v854
        %v856 = vrot.slane %v855, 2
        %v857 = vadd.f32 %v855, %v856
        %v858 = vrot.slane %v857, 1
        %v859 = vadd.f32 %v857, %v858
        %v860 = vxor.u32 %v859, 2147483648
        %v861 = vmul.f32 %v860, 1.442695
        %v862 = vpow.pop %v861
        %v863 = vadd.f32 %v862, 1.0
        %v864 = vrcp.pop %v863
        %v865 = vmul.f32 1.0, %v864
        %vm866 = vcmask 57344
        %867 = vst.msk [vmem:[%s219] sm:$0x1] %vm866, %v865
        %s868 = sand.u32 %s102, 1
        %s869 = scalar_lea.sflag [#allocation6], %s868
        %s870 = sand.u32 %s102, 1
        %s871 = scalar_lea.vmem [#allocation10], %s870
        // Predicated region
        $region45: #{tpu_custom_call.1} parent=31 // pred_check
          %p872 = pneg %p112
        $region46: #{tpu_custom_call.1} parent=31 // pred_check_branch
          %874 = sbr.rel (%p872) target = $region48
        $region47: #{tpu_custom_call.1} parent=31 // pred_region
          %s876 = ssub.s32 16, 16
          %877 = vsyncadd %s869, %s876
          %s878 = smul.addr %s26, 16
          %s879 = scalar_lea.hbm %s4, %s878
          %s881 = sshll.u32 %s871, 4
          %s882 = int_to_ptr.vmem [resolvable:$true] %s881
          %884 = dma.vmem_to_hbm [thread:$0]  %s882, 16, %s879, %s869
        $region48: #{tpu_custom_call.1} parent=31 // pred_fallthru
          _
      $region32: #{tpu_custom_call.1} parent=5 // pred_fallthru
        _
      %p885 = scmp.le.s32.totalorder 2, %s21
      // Predicated region
      $region49: #{tpu_custom_call.1} parent=5 // pred_check
        %p886 = pneg %p885
      $region50: #{tpu_custom_call.1} parent=5 // pred_check_branch
        %888 = sbr.rel (%p886) target = $region52
      $region51: #{tpu_custom_call.1} parent=5 // pred_region
        %s889 = ssub.s32 %s21, 2
        // Predicated region
        $region53: #{tpu_custom_call.1} parent=51 // pred_check
          %p890 = pneg %p118
        $region54: #{tpu_custom_call.1} parent=51 // pred_check_branch
          %892 = sbr.rel (%p890) target = $region56
        $region55: #{tpu_custom_call.1} parent=51 // pred_region
          %s893 = sand.u32 %s103, 1
          %s894 = scalar_lea.sflag [#allocation6], %s893
          %s895 = sand.u32 %s103, 1
          %s896 = scalar_lea.vmem [#allocation10], %s895
          %897 = dma.done %s894, 16
        $region56: #{tpu_custom_call.1} parent=51 // pred_fallthru
          _
      $region52: #{tpu_custom_call.1} parent=5 // pred_fallthru
        _
    $region6: #{tpu_custom_call.1} parent=1 // loop_footer
      %s25 = sadd.s32 1, %s21
    $region7: #{tpu_custom_call.1} parent=1 // loop_footer_branch
      %20 = sbr.rel target = $region3
    $region8: #{tpu_custom_call.1} parent=1 // loop_exit
      _
    %898 = vsyncpa [#allocation5], 1
    %s899 = scalar_lea.sflag [#allocation5], 1
    %900 = vsyncpa %s899, 1
    %901 = vsyncpa [#allocation8], 1
    %902 = vsyncpa [#allocation6], 1
    %s903 = scalar_lea.sflag [#allocation6], 1
    %904 = vsyncpa %s903, 1

</llo_original>
